<compile_context>
chip_gen: v7x
topology: tpu7x:2x2x1
jax: 0.10.0
libtpu: 0.0.40
codegen_flags: <defaults>
</compile_context>

<pallas_src>
import math

import jax
import jax.numpy as jnp
from jax import lax
from jax.experimental import pallas as pl
from jax.experimental.pallas import tpu as pltpu  # noqa: F401  (TPU backend)


def positionalencoding1d(d_model: int, length: int) -> jnp.ndarray:
    """JAX port of the PyTorch positionalencoding1d helper. Returns (length, d_model)."""
    if d_model % 2 != 0:
        raise ValueError(
            "Cannot use sin/cos positional encoding with odd dim (got dim={:d})".format(d_model)
        )
    position = jnp.arange(0, length, dtype=jnp.float32)[:, None]
    div_term = jnp.exp(
        jnp.arange(0, d_model, 2, dtype=jnp.float32) * -(math.log(10000.0) / d_model)
    )
    pe = jnp.zeros((length, d_model), dtype=jnp.float32)
    pe = pe.at[:, 0::2].set(jnp.sin(position * div_term))
    pe = pe.at[:, 1::2].set(jnp.cos(position * div_term))
    return pe


def precompute_constants(pos_embed, w_phi, w_conv2):
    """One-time (init-time) packing of the constant operands into a single buffer.

    Layout (rows, all with lane width C):
      [0   : T  ]  pos_embed  (T, C)
      [T   : 2T ]  w_phi      (T, C)   phi Conv1d weight, original (out, in) orientation
      [2T  : 2T+C] w_conv2    (C, C)   conv2 weight, original (out, in) orientation
    """
    pos = pos_embed.astype(jnp.float32)
    wphi = w_phi.astype(jnp.float32)
    w2 = w_conv2.astype(jnp.float32)
    return jnp.concatenate([pos, wphi, w2], axis=0)   # (2*T + C, C)


def temporal_sim_gc_kernel(x_ref, consts_ref, out_ref):
    """Whole forward pass in one grid point (everything fits comfortably in VMEM).

    x_ref      : (B, T, C)      squeezed input
    consts_ref : (2*T + C, C)   packed [pos ; w_phi ; w_conv2]  (single DMA)
    out_ref    : (B, C)         mean over T of (conv2(relu(bn(y))) + x)
    """
    B, T, C = x_ref.shape

    pos = consts_ref[0:T, :]                 # (T, C)  sublane-aligned static views
    wphi = consts_ref[T:2 * T, :]            # (T, C)
    w2 = consts_ref[2 * T:2 * T + C, :]      # (C, C)

    x = x_ref[...]                           # (B, T, C) f32
    xt = x + pos[None, :, :]                 # (B, T, C) == x_trans^T
    xt2 = xt.reshape(B * T, C)               # flatten batch into M (8-aligned rows)

    # --- phi 1x1 conv, batch flattened:  logits[m, s] = sum_c xt2[m, c] * wphi[s, c]
    logits = lax.dot_general(
        xt2, wphi, (((1,), (1,)), ((), ())),
        preferred_element_type=jnp.float32)                        # (B*T, T)

    # --- softmax over the phi output-channel axis (lane axis in this layout) -----
    m = jnp.max(logits, axis=-1, keepdims=True)
    e = jnp.exp(logits - m)
    denom = jnp.sum(e, axis=-1, keepdims=True)
    attn = e * pl.reciprocal(denom, approx=True)                   # (B*T, T)

    # --- y[b,t,c] = sum_s attn[b,t,s] * xt[b,s,c]; explicit per-batch MXU dots ----
    y_parts = [
        jnp.dot(attn[b * T:(b + 1) * T, :], xt2[b * T:(b + 1) * T, :],
                preferred_element_type=jnp.float32)                # (T, C)
        for b in range(B)
    ]
    yf = jnp.concatenate(y_parts, axis=0)                          # (B*T, C)

    # --- BatchNorm1d(C): training-mode batch stats over (B, T); gamma=1, beta=0.
    #     Single pass: E[y] and E[y^2]; clamp var at 0 for numerical safety.
    inv_n = 1.0 / (B * T)
    mean = jnp.sum(yf, axis=0, keepdims=True) * inv_n              # (1, C)
    ex2 = jnp.sum(yf * yf, axis=0, keepdims=True) * inv_n          # (1, C)
    var = jnp.maximum(ex2 - mean * mean, 0.0)
    r = jnp.maximum((yf - mean) * lax.rsqrt(var + 1e-5), 0.0)      # (B*T, C), ReLU fused

    # --- fold the final mean over T through the (linear) conv2 -------------------
    #     out = mean_t(conv2(r) + x) = (mean_t r) @ W2^T + mean_t x
    inv_t = 1.0 / T
    r_mean = jnp.sum(r.reshape(B, T, C), axis=1) * inv_t           # (B, C)
    x_mean = jnp.sum(x, axis=1) * inv_t                            # (B, C)
    y2 = lax.dot_general(r_mean, w2, (((1,), (1,)), ((), ())),
                         preferred_element_type=jnp.float32)       # (B, C)
    out_ref[...] = y2 + x_mean


@jax.jit
def temporal_sim_gc(x, consts):
    """x: (B, n_seg, C, 1, 1) float32, consts from precompute_constants -> (B, 1, C, 1, 1)."""
    b, t, c = x.shape[0], x.shape[1], x.shape[2]
    x3 = x.reshape(b, t, c).astype(jnp.float32)     # contiguity-preserving, free under jit

    flops = 2 * (b * t) * c * t + 2 * b * t * t * c + 2 * b * c * c
    transcendentals = b * t * t + b * t + c
    bytes_accessed = 4 * (b * t * c + consts.size + b * c)

    out = pl.pallas_call(
        temporal_sim_gc_kernel,
        out_shape=jax.ShapeDtypeStruct((b, c), jnp.float32),
        in_specs=[
            pl.BlockSpec((b, t, c), lambda: (0, 0, 0)),
            pl.BlockSpec(consts.shape, lambda: (0, 0)),
        ],
        out_specs=pl.BlockSpec((b, c), lambda: (0, 0)),
        cost_estimate=pl.CostEstimate(
            flops=flops,
            transcendentals=transcendentals,
            bytes_accessed=bytes_accessed,
        ),
    )(x3, consts)

    return out.reshape(b, 1, c, 1, 1)


def temporal_sim_gc_ref(x, pos_embed, w_phi, w_conv2):
    """Pure-JAX mirror of the PyTorch forward (training-mode BN, gamma=1, beta=0)."""
    b, t, c = x.shape[0], x.shape[1], x.shape[2]
    xs = x.reshape(b, t, c).astype(jnp.float32)
    x_trans = jnp.transpose(xs + pos_embed[None], (0, 2, 1))          # (B, C, T)
    x_phi = jnp.einsum("oc,bct->bot", w_phi, x_trans)                  # (B, S, T)
    attn = jax.nn.softmax(x_phi, axis=1)
    y = jnp.einsum("bcs,bst->bct", x_trans, attn)                      # (B, C, T)
    mean = jnp.mean(y, axis=(0, 2), keepdims=True)
    var = jnp.mean((y - mean) ** 2, axis=(0, 2), keepdims=True)
    y = jnp.maximum((y - mean) / jnp.sqrt(var + 1e-5), 0.0)
    y = jnp.einsum("oc,bct->bot", w_conv2, y)                          # (B, C, T)
    y = jnp.transpose(y, (0, 2, 1)).reshape(x.shape)
    return (y + x).mean(axis=1, keepdims=True)


if __name__ == "__main__":
    B = 2          # batch
    N_SEG = 8      # temporal segments
    C = 32         # in_channels (must be even for the positional encoding)

    key = jax.random.PRNGKey(0)
    kx, kphi, k2 = jax.random.split(key, 3)

    # Input: (B, n_seg, C, 1, 1) as implied by `b, n_seg, c, _, _ = x.shape`
    x = jax.random.normal(kx, (B, N_SEG, C, 1, 1), dtype=jnp.float32)

    # phi: Conv1d(C -> n_seg, k=1, bias=False) -> weight (n_seg, C)
    w_phi = jax.random.normal(kphi, (N_SEG, C), dtype=jnp.float32) * (1.0 / math.sqrt(C))
    # conv2: Conv1d(C -> C, k=1, bias=False)   -> weight (C, C)
    w_conv2 = jax.random.normal(k2, (C, C), dtype=jnp.float32) * (1.0 / math.sqrt(C))
    # positional embedding (n_seg, C)
    pos_embed = positionalencoding1d(C, N_SEG)

    # One-time init-side packing of all constants (hoisted out of the call path).
    consts = jax.block_until_ready(precompute_constants(pos_embed, w_phi, w_conv2))

    out = temporal_sim_gc(x, consts)
    jax.block_until_ready(out)
    assert out.shape == (B, 1, C, 1, 1), out.shape

    ref = temporal_sim_gc_ref(x, pos_embed, w_phi, w_conv2)
    max_err = float(jnp.max(jnp.abs(out - ref)))
    assert jnp.allclose(out, ref, rtol=1e-2, atol=1e-2), max_err

    print("KERNEL_OK")
</pallas_src>

<mosaic_0001>
module attributes {stable_mosaic.version = 11 : i64} {
  func.func @temporal_sim_gc_kernel(%arg0: memref<2x8x32xf32, #tpu.memory_space<vmem>>, %arg1: memref<48x32xf32, #tpu.memory_space<vmem>>, %arg2: memref<2x32xf32, #tpu.memory_space<vmem>>) attributes {dimension_semantics = [], scalar_prefetch = 0 : i64, scratch_operands = 0 : i64, tpu.core_type = #tpu.core_type<tc>} {
    %c0 = arith.constant 0 : index
    %c0_0 = arith.constant 0 : index
    %0 = vector.load %arg1[%c0, %c0_0] : memref<48x32xf32, #tpu.memory_space<vmem>>, vector<8x32xf32>
    %c8 = arith.constant 8 : index
    %c0_1 = arith.constant 0 : index
    %1 = vector.load %arg1[%c8, %c0_1] : memref<48x32xf32, #tpu.memory_space<vmem>>, vector<8x32xf32>
    %c16 = arith.constant 16 : index
    %c0_2 = arith.constant 0 : index
    %2 = vector.load %arg1[%c16, %c0_2] : memref<48x32xf32, #tpu.memory_space<vmem>>, vector<32x32xf32>
    %c0_3 = arith.constant 0 : index
    %c0_4 = arith.constant 0 : index
    %c0_5 = arith.constant 0 : index
    %3 = vector.load %arg0[%c0_3, %c0_4, %c0_5] : memref<2x8x32xf32, #tpu.memory_space<vmem>>, vector<2x8x32xf32>
    %4 = vector.shape_cast %0 : vector<8x32xf32> to vector<1x8x32xf32>
    %5 = vector.broadcast %4 : vector<1x8x32xf32> to vector<2x8x32xf32>
    %6 = arith.addf %3, %5 : vector<2x8x32xf32>
    %7 = vector.shape_cast %6 : vector<2x8x32xf32> to vector<16x32xf32>
    %cst = arith.constant dense<0.000000e+00> : vector<16x8xf32>
    %8 = tpu.matmul %7, %1, %cst {dimension_numbers = #tpu.dot_dimension_numbers<[1], [1], [0], [0], [0, 0, 1, 0], [], []>} : vector<16x32xf32>, vector<8x32xf32>, vector<16x8xf32> -> vector<16x8xf32>
    %cst_6 = arith.constant dense<0xFF800000> : vector<16xf32>
    %9 = vector.multi_reduction <maximumf>, %8, %cst_6 [1] : vector<16x8xf32> to vector<16xf32>
    %10 = vector.shape_cast %9 : vector<16xf32> to vector<16x1xf32>
    %11 = vector.broadcast %10 : vector<16x1xf32> to vector<16x8xf32>
    %12 = arith.subf %8, %11 : vector<16x8xf32>
    %13 = math.exp %12 : vector<16x8xf32>
    %cst_7 = arith.constant dense<0.000000e+00> : vector<16xf32>
    %14 = vector.multi_reduction <add>, %13, %cst_7 [1] : vector<16x8xf32> to vector<16xf32>
    %15 = vector.shape_cast %14 : vector<16xf32> to vector<16x1xf32>
    %16 = tpu.reciprocal %15 {approx = true} : vector<16x1xf32> -> vector<16x1xf32>
    %17 = vector.broadcast %16 : vector<16x1xf32> to vector<16x8xf32>
    %18 = arith.mulf %13, %17 : vector<16x8xf32>
    %19 = vector.extract_strided_slice %18 {offsets = [0, 0], sizes = [8, 8], strides = [1, 1]} : vector<16x8xf32> to vector<8x8xf32>
    %20 = vector.extract_strided_slice %7 {offsets = [0, 0], sizes = [8, 32], strides = [1, 1]} : vector<16x32xf32> to vector<8x32xf32>
    %cst_8 = arith.constant dense<0.000000e+00> : vector<8x32xf32>
    %21 = tpu.matmul %19, %20, %cst_8 {dimension_numbers = #tpu.dot_dimension_numbers<[1], [0], [0], [1], [0, 0, 1, 1], [], []>} : vector<8x8xf32>, vector<8x32xf32>, vector<8x32xf32> -> vector<8x32xf32>
    %22 = vector.extract_strided_slice %18 {offsets = [8, 0], sizes = [8, 8], strides = [1, 1]} : vector<16x8xf32> to vector<8x8xf32>
    %23 = vector.extract_strided_slice %7 {offsets = [8, 0], sizes = [8, 32], strides = [1, 1]} : vector<16x32xf32> to vector<8x32xf32>
    %cst_9 = arith.constant dense<0.000000e+00> : vector<8x32xf32>
    %24 = tpu.matmul %22, %23, %cst_9 {dimension_numbers = #tpu.dot_dimension_numbers<[1], [0], [0], [1], [0, 0, 1, 1], [], []>} : vector<8x8xf32>, vector<8x32xf32>, vector<8x32xf32> -> vector<8x32xf32>
    %25 = tpu.concatenate %21, %24 in 0 : vector<8x32xf32>, vector<8x32xf32> -> vector<16x32xf32>
    %cst_10 = arith.constant dense<0.000000e+00> : vector<32xf32>
    %26 = vector.multi_reduction <add>, %25, %cst_10 [0] : vector<16x32xf32> to vector<32xf32>
    %27 = vector.shape_cast %26 : vector<32xf32> to vector<1x32xf32>
    %cst_11 = arith.constant 6.250000e-02 : f32
    %28 = vector.broadcast %cst_11 : f32 to vector<1x32xf32>
    %29 = arith.mulf %27, %28 : vector<1x32xf32>
    %30 = arith.mulf %25, %25 : vector<16x32xf32>
    %cst_12 = arith.constant dense<0.000000e+00> : vector<32xf32>
    %31 = vector.multi_reduction <add>, %30, %cst_12 [0] : vector<16x32xf32> to vector<32xf32>
    %32 = vector.shape_cast %31 : vector<32xf32> to vector<1x32xf32>
    %cst_13 = arith.constant 6.250000e-02 : f32
    %33 = vector.broadcast %cst_13 : f32 to vector<1x32xf32>
    %34 = arith.mulf %32, %33 : vector<1x32xf32>
    %35 = arith.mulf %29, %29 : vector<1x32xf32>
    %36 = arith.subf %34, %35 : vector<1x32xf32>
    %cst_14 = arith.constant 0.000000e+00 : f32
    %37 = vector.broadcast %cst_14 : f32 to vector<1x32xf32>
    %38 = arith.maximumf %36, %37 : vector<1x32xf32>
    %39 = vector.broadcast %29 : vector<1x32xf32> to vector<16x32xf32>
    %40 = arith.subf %25, %39 : vector<16x32xf32>
    %cst_15 = arith.constant 9.99999974E-6 : f32
    %41 = vector.broadcast %cst_15 : f32 to vector<1x32xf32>
    %42 = arith.addf %38, %41 : vector<1x32xf32>
    %43 = math.rsqrt %42 : vector<1x32xf32>
    %44 = vector.broadcast %43 : vector<1x32xf32> to vector<16x32xf32>
    %45 = arith.mulf %40, %44 : vector<16x32xf32>
    %cst_16 = arith.constant 0.000000e+00 : f32
    %46 = vector.broadcast %cst_16 : f32 to vector<16x32xf32>
    %47 = arith.maximumf %45, %46 : vector<16x32xf32>
    %48 = vector.shape_cast %47 : vector<16x32xf32> to vector<2x8x32xf32>
    %cst_17 = arith.constant dense<0.000000e+00> : vector<2x32xf32>
    %49 = vector.multi_reduction <add>, %48, %cst_17 [1] : vector<2x8x32xf32> to vector<2x32xf32>
    %cst_18 = arith.constant 1.250000e-01 : f32
    %50 = vector.broadcast %cst_18 : f32 to vector<2x32xf32>
    %51 = arith.mulf %49, %50 : vector<2x32xf32>
    %cst_19 = arith.constant dense<0.000000e+00> : vector<2x32xf32>
    %52 = vector.multi_reduction <add>, %3, %cst_19 [1] : vector<2x8x32xf32> to vector<2x32xf32>
    %cst_20 = arith.constant 1.250000e-01 : f32
    %53 = vector.broadcast %cst_20 : f32 to vector<2x32xf32>
    %54 = arith.mulf %52, %53 : vector<2x32xf32>
    %cst_21 = arith.constant dense<0.000000e+00> : vector<2x32xf32>
    %55 = tpu.matmul %51, %2, %cst_21 {dimension_numbers = #tpu.dot_dimension_numbers<[1], [1], [0], [0], [0, 0, 1, 0], [], []>} : vector<2x32xf32>, vector<32x32xf32>, vector<2x32xf32> -> vector<2x32xf32>
    %56 = arith.addf %55, %54 : vector<2x32xf32>
    %c0_22 = arith.constant 0 : index
    %c0_23 = arith.constant 0 : index
    %57 = vector.load %arg2[%c0_22, %c0_23] : memref<2x32xf32, #tpu.memory_space<vmem>>, vector<2x32xf32>
    tpu.vector_store %arg2[%c0_22, %c0_23], %56 {strides = array<i32>} : memref<2x32xf32, #tpu.memory_space<vmem>>, vector<2x32xf32>,
    return
  }
}

</mosaic_0001>

<llo_original>
// kernel: temporal_sim_gc.1
$region0: #{temporal_sim_gc.1}
  #allocation0 [shape = 'u32[]', space=smem, size = 0x4, offset = 0x4, fixed_abs, tag = 'smem constant byte address 0x4 - core index']
  #allocation1 [shape = 'u32[144,128]{1,0:T(1,128)}', space=vmem, size = 0x12000, scoped, tag = 'internal scratch']
  %s0 = inlined_call_operand.vmem [shape: f32[2,8,32], index: 0, kind: input, shape index: {}]
  %s1 = inlined_call_operand.vmem [shape: f32[48,32], index: 1, kind: input, shape index: {}]
  %s2 = inlined_call_operand.hbm [shape: f32[2,32], index: 2, kind: output, shape index: {}]
  %s3 = sld [smem:[#allocation0]]
  $region18: #{temporal_sim_gc.1} parent=0
    _
  %s5 = ssub.s32 1, %s3
  %s6 = scalar_select 0, %s5, %s3
  $region1: #{temporal_sim_gc.1} parent=0
    #allocation2 [shape = 'u8[1024]{0}', space=vmem, size = 0x400, scoped, tag = 'output window, operand 0, single buffered']
    #allocation3 [shape = 's32[1]{0}', space=sflag, size = 0x4, scoped, tag = 'scoped memory for temporal_sim_gc.1']
    %7 = vsyncpa [#allocation3], 0
    // Predicated region
    $region2: #{temporal_sim_gc.1} parent=1 // pred_check
      _
    $region3: #{temporal_sim_gc.1} parent=1 // pred_check_branch
      %9 = sbr.rel (0) target = $region5
    $region4: #{temporal_sim_gc.1} parent=1 // pred_region
      _
    $region5: #{temporal_sim_gc.1} parent=1 // pred_fallthru
      _
    // Predicated region
    $region6: #{temporal_sim_gc.1} parent=1 // pred_check
      _
    $region7: #{temporal_sim_gc.1} parent=1 // pred_check_branch
      %11 = sbr.rel (0) target = $region9
    $region8: #{temporal_sim_gc.1} parent=1 // pred_region
      _
    $region9: #{temporal_sim_gc.1} parent=1 // pred_fallthru
      _
    %v12 = vld [vmem:[%s1] sm:$0xff]
    %v13 = vld [vmem:[%s1 + $0x8] sm:$0xff]
    %v14 = vld [vmem:[%s1 + $0x10] sm:$0xff]
    %v15 = vld [vmem:[%s1 + $0x18] sm:$0xff]
    %v16 = vld [vmem:[%s1 + $0x20] sm:$0xff]
    %v17 = vld [vmem:[%s1 + $0x28] sm:$0xff]
    %v18 = vld [vmem:[%s0] sm:$0xff]
    %v19 = vld [vmem:[%s0 + $0x8] sm:$0xff]
    %v20 = vadd.f32 %v18, %v12
    %v21 = vadd.f32 %v19, %v12
    %vm22 = vcmask 261120
    %v24 = vsel %vm22, %v20, 0
    %v27 = vsel %vm22, %v21, 0
    %v30 = vsel %vm22, %v13, 0
    %32 = vmatprep.subr.mxu0 0.0
    %33 = vmatpush1.xpose.msra.mxu0 %v30
    %34 = vmatprep.subr.mxu0 0.0
    %35 = vmatpush1.xpose.msra.mxu0 0.0
    %36 = vmatprep.subr.mxu0 0.0
    %37 = vmatpush1.xpose.msra.mxu0 0.0
    %38 = vmatprep.subr.mxu0 0.0
    %39 = vmatpush1.xpose.msra.mxu0 0.0
    %40 = vmatprep.subr.mxu0 0.0
    %41 = vmatpush1.xpose.msra.mxu0 0.0
    %42 = vmatprep.subr.mxu0 0.0
    %43 = vmatpush1.xpose.msra.mxu0 0.0
    %44 = vmatprep.subr.mxu0 0.0
    %45 = vmatpush1.xpose.msra.mxu0 0.0
    %46 = vmatprep.subr.mxu0 0.0
    %47 = vmatpush1.xpose.msra.mxu0 0.0
    %48 = vmatprep.subr.mxu0 0.0
    %49 = vmatpush1.xpose.msra.mxu0 0.0
    %50 = vmatprep.subr.mxu0 0.0
    %51 = vmatpush1.xpose.msra.mxu0 0.0
    %52 = vmatprep.subr.mxu0 0.0
    %53 = vmatpush1.xpose.msra.mxu0 0.0
    %54 = vmatprep.subr.mxu0 0.0
    %55 = vmatpush1.xpose.msra.mxu0 0.0
    %56 = vmatprep.subr.mxu0 0.0
    %57 = vmatpush1.xpose.msra.mxu0 0.0
    %58 = vmatprep.subr.mxu0 0.0
    %59 = vmatpush1.xpose.msra.mxu0 0.0
    %60 = vmatprep.subr.mxu0 0.0
    %61 = vmatpush1.xpose.msra.mxu0 0.0
    %62 = vmatprep.subr.mxu0 0.0
    %63 = vmatpush1.xpose.msra.mxu0 0.0
    %64 = vmatprep.subr.mxu0 0.0
    %65 = vmatpush1.xpose.msra.mxu0 0.0
    %66 = vmatprep.subr.mxu0 0.0
    %67 = vmatpush1.xpose.msra.mxu0 0.0
    %68 = vmatprep.subr.mxu0 0.0
    %69 = vmatpush1.xpose.msra.mxu0 0.0
    %70 = vmatprep.subr.mxu0 0.0
    %71 = vmatpush1.xpose.msra.mxu0 0.0
    %72 = vmatprep.subr.mxu0 0.0
    %73 = vmatpush1.xpose.msra.mxu0 0.0
    %74 = vmatprep.subr.mxu0 0.0
    %75 = vmatpush1.xpose.msra.mxu0 0.0
    %76 = vmatprep.subr.mxu0 0.0
    %77 = vmatpush1.xpose.msra.mxu0 0.0
    %78 = vmatprep.subr.mxu0 0.0
    %79 = vmatpush1.xpose.msra.mxu0 0.0
    %80 = vmatprep.subr.mxu0 0.0
    %81 = vmatpush1.xpose.msra.mxu0 0.0
    %82 = vmatprep.subr.mxu0 0.0
    %83 = vmatpush1.xpose.msra.mxu0 0.0
    %84 = vmatprep.subr.mxu0 0.0
    %85 = vmatpush1.xpose.msra.mxu0 0.0
    %86 = vmatprep.subr.mxu0 0.0
    %87 = vmatpush1.xpose.msra.mxu0 0.0
    %88 = vmatprep.subr.mxu0 0.0
    %89 = vmatpush1.xpose.msra.mxu0 0.0
    %90 = vmatprep.subr.mxu0 0.0
    %91 = vmatpush1.xpose.msra.mxu0 0.0
    %92 = vmatprep.subr.mxu0 0.0
    %93 = vmatpush1.xpose.msra.mxu0 0.0
    %94 = vmatprep.subr.mxu0 0.0
    %95 = vmatpush1.xpose.msra.mxu0 0.0
    %96 = vmatprep.mubr.f32.mxu0 0.0
    %97 = vmatmul.mubr.f32.gmra.mrb[0].mxu0 %v24
    %v98 = vpop.f32.mrb[0].mxu0
    %v99 = vadd.f32 0.0, %v98
    %v100 = vpop.f32.mrb[0].mxu0
    %101 = vmatprep.mubr.f32.mxu0 0.0
    %102 = vmatmul.mubr.f32.gmra.mrb[0].mxu0 %v27
    %v103 = vpop.f32.mrb[0].mxu0
    %v104 = vadd.f32 0.0, %v103
    %v105 = vpop.f32.mrb[0].mxu0
    %106 = vdwg.mxu0
    %vm107 = vcmask 64512
    %v108 = vsel %vm107, %v99, -inf
    %109 = vmax.xlane.f32.xlu0 %v108
    %v110 = vpop.xlane.xlu0 %109
    %v111 = vsel %vm107, %v104, -inf
    %112 = vmax.xlane.f32.xlu0 %v111
    %v113 = vpop.xlane.xlu0 %112
    %v114 = vsub.f32 %v99, %v110
    %v115 = vsub.f32 %v104, %v113
    %v116 = vmul.f32 %v114, 1.442695
    %v117 = vpow.pop %v116
    %v118 = vmul.f32 %v115, 1.442695
    %v119 = vpow.pop %v118
    %v120 = vsel %vm107, %v117, 0.0
    %121 = vadd.xlane.f32.xlu0 %v120
    %v122 = vpop.xlane.xlu0 %121
    %v123 = vsel %vm107, %v119, 0.0
    %124 = vadd.xlane.f32.xlu0 %v123
    %v125 = vpop.xlane.xlu0 %124
    %v126 = vrcp.pop %v122
    %v127 = vrcp.pop %v125
    %v128 = vmul.f32 %v117, %v126
    %v129 = vmul.f32 %v119, %v127
    %v131 = vsel %vm107, %v128, 0
    %133 = vmatprep.subr.mxu0 0.0
    %134 = vmatpush1.msra.mxu0 %v20
    %135 = vmatprep.subr.mxu0 0.0
    %136 = vmatpush1.msra.mxu0 0.0
    %137 = vmatprep.subr.mxu0 0.0
    %138 = vmatpush1.msra.mxu0 0.0
    %139 = vmatprep.subr.mxu0 0.0
    %140 = vmatpush1.msra.mxu0 0.0
    %141 = vmatprep.subr.mxu0 0.0
    %142 = vmatpush1.msra.mxu0 0.0
    %143 = vmatprep.subr.mxu0 0.0
    %144 = vmatpush1.msra.mxu0 0.0
    %145 = vmatprep.subr.mxu0 0.0
    %146 = vmatpush1.msra.mxu0 0.0
    %147 = vmatprep.subr.mxu0 0.0
    %148 = vmatpush1.msra.mxu0 0.0
    %149 = vmatprep.subr.mxu0 0.0
    %150 = vmatpush1.msra.mxu0 0.0
    %151 = vmatprep.subr.mxu0 0.0
    %152 = vmatpush1.msra.mxu0 0.0
    %153 = vmatprep.subr.mxu0 0.0
    %154 = vmatpush1.msra.mxu0 0.0
    %155 = vmatprep.subr.mxu0 0.0
    %156 = vmatpush1.msra.mxu0 0.0
    %157 = vmatprep.subr.mxu0 0.0
    %158 = vmatpush1.msra.mxu0 0.0
    %159 = vmatprep.subr.mxu0 0.0
    %160 = vmatpush1.msra.mxu0 0.0
    %161 = vmatprep.subr.mxu0 0.0
    %162 = vmatpush1.msra.mxu0 0.0
    %163 = vmatprep.subr.mxu0 0.0
    %164 = vmatpush1.msra.mxu0 0.0
    %165 = vmatprep.subr.mxu0 0.0
    %166 = vmatpush1.msra.mxu0 0.0
    %167 = vmatprep.subr.mxu0 0.0
    %168 = vmatpush1.msra.mxu0 0.0
    %169 = vmatprep.subr.mxu0 0.0
    %170 = vmatpush1.msra.mxu0 0.0
    %171 = vmatprep.subr.mxu0 0.0
    %172 = vmatpush1.msra.mxu0 0.0
    %173 = vmatprep.subr.mxu0 0.0
    %174 = vmatpush1.msra.mxu0 0.0
    %175 = vmatprep.subr.mxu0 0.0
    %176 = vmatpush1.msra.mxu0 0.0
    %177 = vmatprep.subr.mxu0 0.0
    %178 = vmatpush1.msra.mxu0 0.0
    %179 = vmatprep.subr.mxu0 0.0
    %180 = vmatpush1.msra.mxu0 0.0
    %181 = vmatprep.subr.mxu0 0.0
    %182 = vmatpush1.msra.mxu0 0.0
    %183 = vmatprep.subr.mxu0 0.0
    %184 = vmatpush1.msra.mxu0 0.0
    %185 = vmatprep.subr.mxu0 0.0
    %186 = vmatpush1.msra.mxu0 0.0
    %187 = vmatprep.subr.mxu0 0.0
    %188 = vmatpush1.msra.mxu0 0.0
    %189 = vmatprep.subr.mxu0 0.0
    %190 = vmatpush1.msra.mxu0 0.0
    %191 = vmatprep.subr.mxu0 0.0
    %192 = vmatpush1.msra.mxu0 0.0
    %193 = vmatprep.subr.mxu0 0.0
    %194 = vmatpush1.msra.mxu0 0.0
    %195 = vmatprep.subr.mxu0 0.0
    %196 = vmatpush1.msra.mxu0 0.0
    %197 = vmatprep.mubr.f32.mxu0 0.0
    %198 = vmatmul.mubr.f32.gmra.mrb[0].mxu0 %v131
    %v199 = vpop.f32.mrb[0].mxu0
    %v200 = vadd.f32 0.0, %v199
    %v201 = vpop.f32.mrb[0].mxu0
    %202 = vdwg.mxu0
    %v204 = vsel %vm107, %v129, 0
    %206 = vmatprep.subr.mxu0 0.0
    %207 = vmatpush1.msra.mxu0 %v21
    %208 = vmatprep.subr.mxu0 0.0
    %209 = vmatpush1.msra.mxu0 0.0
    %210 = vmatprep.subr.mxu0 0.0
    %211 = vmatpush1.msra.mxu0 0.0
    %212 = vmatprep.subr.mxu0 0.0
    %213 = vmatpush1.msra.mxu0 0.0
    %214 = vmatprep.subr.mxu0 0.0
    %215 = vmatpush1.msra.mxu0 0.0
    %216 = vmatprep.subr.mxu0 0.0
    %217 = vmatpush1.msra.mxu0 0.0
    %218 = vmatprep.subr.mxu0 0.0
    %219 = vmatpush1.msra.mxu0 0.0
    %220 = vmatprep.subr.mxu0 0.0
    %221 = vmatpush1.msra.mxu0 0.0
    %222 = vmatprep.subr.mxu0 0.0
    %223 = vmatpush1.msra.mxu0 0.0
    %224 = vmatprep.subr.mxu0 0.0
    %225 = vmatpush1.msra.mxu0 0.0
    %226 = vmatprep.subr.mxu0 0.0
    %227 = vmatpush1.msra.mxu0 0.0
    %228 = vmatprep.subr.mxu0 0.0
    %229 = vmatpush1.msra.mxu0 0.0
    %230 = vmatprep.subr.mxu0 0.0
    %231 = vmatpush1.msra.mxu0 0.0
    %232 = vmatprep.subr.mxu0 0.0
    %233 = vmatpush1.msra.mxu0 0.0
    %234 = vmatprep.subr.mxu0 0.0
    %235 = vmatpush1.msra.mxu0 0.0
    %236 = vmatprep.subr.mxu0 0.0
    %237 = vmatpush1.msra.mxu0 0.0
    %238 = vmatprep.subr.mxu0 0.0
    %239 = vmatpush1.msra.mxu0 0.0
    %240 = vmatprep.subr.mxu0 0.0
    %241 = vmatpush1.msra.mxu0 0.0
    %242 = vmatprep.subr.mxu0 0.0
    %243 = vmatpush1.msra.mxu0 0.0
    %244 = vmatprep.subr.mxu0 0.0
    %245 = vmatpush1.msra.mxu0 0.0
    %246 = vmatprep.subr.mxu0 0.0
    %247 = vmatpush1.msra.mxu0 0.0
    %248 = vmatprep.subr.mxu0 0.0
    %249 = vmatpush1.msra.mxu0 0.0
    %250 = vmatprep.subr.mxu0 0.0
    %251 = vmatpush1.msra.mxu0 0.0
    %252 = vmatprep.subr.mxu0 0.0
    %253 = vmatpush1.msra.mxu0 0.0
    %254 = vmatprep.subr.mxu0 0.0
    %255 = vmatpush1.msra.mxu0 0.0
    %256 = vmatprep.subr.mxu0 0.0
    %257 = vmatpush1.msra.mxu0 0.0
    %258 = vmatprep.subr.mxu0 0.0
    %259 = vmatpush1.msra.mxu0 0.0
    %260 = vmatprep.subr.mxu0 0.0
    %261 = vmatpush1.msra.mxu0 0.0
    %262 = vmatprep.subr.mxu0 0.0
    %263 = vmatpush1.msra.mxu0 0.0
    %264 = vmatprep.subr.mxu0 0.0
    %265 = vmatpush1.msra.mxu0 0.0
    %266 = vmatprep.subr.mxu0 0.0
    %267 = vmatpush1.msra.mxu0 0.0
    %268 = vmatprep.subr.mxu0 0.0
    %269 = vmatpush1.msra.mxu0 0.0
    %270 = vmatprep.mubr.f32.mxu0 0.0
    %271 = vmatmul.mubr.f32.gmra.mrb[0].mxu0 %v204
    %v272 = vpop.f32.mrb[0].mxu0
    %v273 = vadd.f32 0.0, %v272
    %v274 = vpop.f32.mrb[0].mxu0
    %275 = vdwg.mxu0
    %v276 = vsel %vm22, %v200, 0.0
    %v277 = vsel %vm22, %v273, 0.0
    %v278 = vadd.f32 %v276, %v277
    %v279 = vrot.slane %v278, 4
    %v280 = vadd.f32 %v278, %v279
    %v281 = vrot.slane %v280, 2
    %v282 = vadd.f32 %v280, %v281
    %v283 = vrot.slane %v282, 1
    %v284 = vadd.f32 %v282, %v283
    %v285 = vmul.f32 %v284, 0.0625
    %v286 = vmul.f32 %v200, %v200
    %v287 = vmul.f32 %v273, %v273
    %v288 = vsel %vm22, %v286, 0.0
    %v289 = vsel %vm22, %v287, 0.0
    %v290 = vadd.f32 %v288, %v289
    %v291 = vrot.slane %v290, 4
    %v292 = vadd.f32 %v290, %v291
    %v293 = vrot.slane %v292, 2
    %v294 = vadd.f32 %v292, %v293
    %v295 = vrot.slane %v294, 1
    %v296 = vadd.f32 %v294, %v295
    %v297 = vmul.f32 %v296, 0.0625
    %v298 = vmul.f32 %v285, %v285
    %v299 = vsub.f32 %v297, %v298
    %v300 = vmax.f32 %v299, 0.0
    %v301 = vsub.f32 %v200, %v285
    %v302 = vsub.f32 %v273, %v285
    %v303 = vadd.f32 %v300, 1e-05
    %v304 = vrsqrt.pop %v303
    %v305 = vmul.f32 %v301, %v304
    %v306 = vmul.f32 %v302, %v304
    %v307 = vmax.f32 %v305, 0.0
    %v308 = vmax.f32 %v306, 0.0
    %v309 = vsel %vm22, %v307, 0.0
    %v310 = vrot.slane %v309, 4
    %v311 = vadd.f32 %v309, %v310
    %v312 = vrot.slane %v311, 2
    %v313 = vadd.f32 %v311, %v312
    %v314 = vrot.slane %v313, 1
    %v315 = vadd.f32 %v313, %v314
    %v316 = vsel %vm22, %v308, 0.0
    %v317 = vrot.slane %v316, 4
    %v318 = vadd.f32 %v316, %v317
    %v319 = vrot.slane %v318, 2
    %v320 = vadd.f32 %v318, %v319
    %v321 = vrot.slane %v320, 1
    %v322 = vadd.f32 %v320, %v321
    %v323 = vmul.f32 %v315, 0.125
    %v324 = vmul.f32 %v322, 0.125
    %v325 = vsel %vm22, %v18, 0.0
    %v326 = vrot.slane %v325, 4
    %v327 = vadd.f32 %v325, %v326
    %v328 = vrot.slane %v327, 2
    %v329 = vadd.f32 %v327, %v328
    %v330 = vrot.slane %v329, 1
    %v331 = vadd.f32 %v329, %v330
    %v332 = vsel %vm22, %v19, 0.0
    %v333 = vrot.slane %v332, 4
    %v334 = vadd.f32 %v332, %v333
    %v335 = vrot.slane %v334, 2
    %v336 = vadd.f32 %v334, %v335
    %v337 = vrot.slane %v336, 1
    %v338 = vadd.f32 %v336, %v337
    %v339 = vmul.f32 %v331, 0.125
    %v340 = vmul.f32 %v338, 0.125
    %vm343 = vcmask 1041409
    %v344 = vsel %vm343, %v324, %v323
    %v347 = vsel %vm343, %v340, %v339
    %v349 = vsel %vm22, %v344, 0
    %v352 = vsel %vm22, %v14, 0
    %v355 = vsel %vm22, %v15, 0
    %v358 = vsel %vm22, %v16, 0
    %v361 = vsel %vm22, %v17, 0
    %363 = vmatprep.subr.mxu0 0.0
    %364 = vmatpush1.xpose.msra.mxu0 %v352
    %365 = vmatprep.subr.mxu0 0.0
    %366 = vmatpush1.xpose.msra.mxu0 %v355
    %367 = vmatprep.subr.mxu0 0.0
    %368 = vmatpush1.xpose.msra.mxu0 %v358
    %369 = vmatprep.subr.mxu0 0.0
    %370 = vmatpush1.xpose.msra.mxu0 %v361
    %371 = vmatprep.subr.mxu0 0.0
    %372 = vmatpush1.xpose.msra.mxu0 0.0
    %373 = vmatprep.subr.mxu0 0.0
    %374 = vmatpush1.xpose.msra.mxu0 0.0
    %375 = vmatprep.subr.mxu0 0.0
    %376 = vmatpush1.xpose.msra.mxu0 0.0
    %377 = vmatprep.subr.mxu0 0.0
    %378 = vmatpush1.xpose.msra.mxu0 0.0
    %379 = vmatprep.subr.mxu0 0.0
    %380 = vmatpush1.xpose.msra.mxu0 0.0
    %381 = vmatprep.subr.mxu0 0.0
    %382 = vmatpush1.xpose.msra.mxu0 0.0
    %383 = vmatprep.subr.mxu0 0.0
    %384 = vmatpush1.xpose.msra.mxu0 0.0
    %385 = vmatprep.subr.mxu0 0.0
    %386 = vmatpush1.xpose.msra.mxu0 0.0
    %387 = vmatprep.subr.mxu0 0.0
    %388 = vmatpush1.xpose.msra.mxu0 0.0
    %389 = vmatprep.subr.mxu0 0.0
    %390 = vmatpush1.xpose.msra.mxu0 0.0
    %391 = vmatprep.subr.mxu0 0.0
    %392 = vmatpush1.xpose.msra.mxu0 0.0
    %393 = vmatprep.subr.mxu0 0.0
    %394 = vmatpush1.xpose.msra.mxu0 0.0
    %395 = vmatprep.subr.mxu0 0.0
    %396 = vmatpush1.xpose.msra.mxu0 0.0
    %397 = vmatprep.subr.mxu0 0.0
    %398 = vmatpush1.xpose.msra.mxu0 0.0
    %399 = vmatprep.subr.mxu0 0.0
    %400 = vmatpush1.xpose.msra.mxu0 0.0
    %401 = vmatprep.subr.mxu0 0.0
    %402 = vmatpush1.xpose.msra.mxu0 0.0
    %403 = vmatprep.subr.mxu0 0.0
    %404 = vmatpush1.xpose.msra.mxu0 0.0
    %405 = vmatprep.subr.mxu0 0.0
    %406 = vmatpush1.xpose.msra.mxu0 0.0
    %407 = vmatprep.subr.mxu0 0.0
    %408 = vmatpush1.xpose.msra.mxu0 0.0
    %409 = vmatprep.subr.mxu0 0.0
    %410 = vmatpush1.xpose.msra.mxu0 0.0
    %411 = vmatprep.subr.mxu0 0.0
    %412 = vmatpush1.xpose.msra.mxu0 0.0
    %413 = vmatprep.subr.mxu0 0.0
    %414 = vmatpush1.xpose.msra.mxu0 0.0
    %415 = vmatprep.subr.mxu0 0.0
    %416 = vmatpush1.xpose.msra.mxu0 0.0
    %417 = vmatprep.subr.mxu0 0.0
    %418 = vmatpush1.xpose.msra.mxu0 0.0
    %419 = vmatprep.subr.mxu0 0.0
    %420 = vmatpush1.xpose.msra.mxu0 0.0
    %421 = vmatprep.subr.mxu0 0.0
    %422 = vmatpush1.xpose.msra.mxu0 0.0
    %423 = vmatprep.subr.mxu0 0.0
    %424 = vmatpush1.xpose.msra.mxu0 0.0
    %425 = vmatprep.subr.mxu0 0.0
    %426 = vmatpush1.xpose.msra.mxu0 0.0
    %427 = vmatprep.mubr.f32.mxu0 0.0
    %428 = vmatmul.mubr.f32.gmra.mrb[0].mxu0 %v349
    %v429 = vpop.f32.mrb[0].mxu0
    %v430 = vadd.f32 %v347, %v429
    %v431 = vpop.f32.mrb[0].mxu0
    %432 = vdwg.mxu0
    %vm433 = vcmask 254976
    %434 = vst.msk [vmem:[#allocation2] sm:$0x3] %vm433, %v430
    // Predicated region
    $region10: #{temporal_sim_gc.1} parent=1 // pred_check
      _
    $region11: #{temporal_sim_gc.1} parent=1 // pred_check_branch
      %436 = sbr.rel (0) target = $region13
    $region12: #{temporal_sim_gc.1} parent=1 // pred_region
      %s438 = ssub.s32 32, 32
      %439 = vsyncadd [#allocation3], %s438
      %s441 = sshll.u32 [#allocation2], 4
      %s442 = int_to_ptr.vmem [resolvable:$true] %s441
      %444 = dma.vmem_to_hbm [thread:$0]  %s442, 32, %s2, [#allocation3]
    $region13: #{temporal_sim_gc.1} parent=1 // pred_fallthru
      _
    // Predicated region
    $region14: #{temporal_sim_gc.1} parent=1 // pred_check
      _
    $region15: #{temporal_sim_gc.1} parent=1 // pred_check_branch
      %446 = sbr.rel (0) target = $region17
    $region16: #{temporal_sim_gc.1} parent=1 // pred_region
      %447 = dma.done [#allocation3], 32
    $region17: #{temporal_sim_gc.1} parent=1 // pred_fallthru
      _
    %448 = vsyncpa [#allocation3], 1

</llo_original>
